<compile_context>
chip_gen: v7x
topology: tpu7x:2x2x1
jax: 0.10.0
libtpu: 0.0.40
codegen_flags: <defaults>
</compile_context>

<pallas_src>
import functools

import jax
import jax.numpy as jnp
from jax.experimental import pallas as pl
from jax.experimental.pallas import tpu as pltpu

BLOCK_SIZE = 8   # max sequence length (the causal tril buffer size)
N_EMBD = 32      # embedding dim
NUM_HEADS = 4
HEAD_SIZE = 8    # per-head size

_NEG_INF = -1e30  # finite "minus infinity" (safe under padding)


def _mha_kernel(x_ref, wqkv_ref, o_ref, *, num_heads, head_size):
    """One batch element per grid point; all heads fused.

    x_ref    : (1, T, C)        VMEM
    wqkv_ref : (C, 3*H*hs)      VMEM  [ Q heads | K heads | V heads ]
    o_ref    : (1, T, H*hs)     VMEM  (already in torch.cat(dim=-1) layout)
    """
    x = x_ref[0]                 # (T, C)
    w = wqkv_ref[...]            # (C, 3*H*hs)

    T = x.shape[0]
    H = num_heads
    hs = head_size
    Hhs = H * hs

    # Single fused projection for Q, K, V of every head (one wide MXU push).
    qkv = jnp.dot(x, w, preferred_element_type=jnp.float32)   # (T, 3*H*hs)
    q = qkv[:, 0 * Hhs:1 * Hhs]                                # (T, H*hs)
    k = qkv[:, 1 * Hhs:2 * Hhs]
    v = qkv[:, 2 * Hhs:3 * Hhs]

    # Shared causal mask (position t attends to positions <= t).
    row = jax.lax.broadcasted_iota(jnp.int32, (T, T), 0)
    col = jax.lax.broadcasted_iota(jnp.int32, (T, T), 1)
    causal = row >= col

    scale = float(hs) ** (-0.5)

    outs = []
    for h in range(H):                      # static unroll, H = 4
        qh = q[:, h * hs:(h + 1) * hs]      # (T, hs)
        kh = k[:, h * hs:(h + 1) * hs]
        vh = v[:, h * hs:(h + 1) * hs]

        logits = jnp.dot(qh, kh.T, preferred_element_type=jnp.float32) * scale
        logits = jnp.where(causal, logits, _NEG_INF)

        # Numerically stable softmax; divide folded into a (T, hs)-sized
        # scale via pl.reciprocal instead of a (T, T) divide.
        m = jnp.max(logits, axis=-1, keepdims=True)
        p = jnp.exp(logits - m)
        denom = jnp.sum(p, axis=-1, keepdims=True)
        out_h = jnp.dot(p, vh, preferred_element_type=jnp.float32)
        out_h = out_h * pl.reciprocal(denom)                    # (T, hs)
        outs.append(out_h)

    # torch.cat([head outputs], dim=-1): one lane-dense (T, H*hs) store.
    o_ref[0] = jnp.concatenate(outs, axis=-1).astype(o_ref.dtype)


def multi_head_attention(x, wq, wk, wv):
    """x: (B, T, C) f32; wq/wk/wv: (H, C, hs) f32 -> (B, T, H*hs) f32."""
    B, T, C = x.shape
    H, _, hs = wq.shape

    # Stack per-head weights into a single (C, 3*H*hs) matrix:
    # columns [h*hs:(h+1)*hs] of each third correspond to head h, so the
    # kernel's output columns line up with torch.cat(..., dim=-1).
    w_q = wq.transpose(1, 0, 2).reshape(C, H * hs)
    w_k = wk.transpose(1, 0, 2).reshape(C, H * hs)
    w_v = wv.transpose(1, 0, 2).reshape(C, H * hs)
    w_qkv = jnp.concatenate([w_q, w_k, w_v], axis=-1)           # (C, 3*H*hs)

    kernel = functools.partial(_mha_kernel, num_heads=H, head_size=hs)

    out = pl.pallas_call(
        kernel,
        out_shape=jax.ShapeDtypeStruct((B, T, H * hs), jnp.float32),
        grid_spec=pltpu.PrefetchScalarGridSpec(
            num_scalar_prefetch=0,
            grid=(B,),
            in_specs=[
                # per-batch activation tile
                pl.BlockSpec((1, T, C), lambda b: (b, 0, 0)),
                # full fused weight matrix, constant block index -> stays
                # resident in VMEM across the whole batch grid
                pl.BlockSpec((C, 3 * H * hs), lambda b: (0, 0)),
            ],
            out_specs=pl.BlockSpec((1, T, H * hs), lambda b: (b, 0, 0)),
        ),
        compiler_params=pltpu.CompilerParams(
            dimension_semantics=("parallel",)),
    )(x, w_qkv)

    return out


def _reference(x, wq, wk, wv):
    """Plain-JAX reference matching the PyTorch forward exactly."""
    B, T, C = x.shape
    H, _, hs = wq.shape
    outs = []
    for h in range(H):
        q = x @ wq[h]
        k = x @ wk[h]
        v = x @ wv[h]
        logits = (q @ jnp.swapaxes(k, -2, -1)) * hs ** (-0.5)
        tril = jnp.tril(jnp.ones((T, T)))
        logits = jnp.where(tril == 0, -jnp.inf, logits)
        wei = jax.nn.softmax(logits, axis=-1)
        outs.append(wei @ v)
    return jnp.concatenate(outs, axis=-1)


if __name__ == "__main__":
    B, T, C = 2, BLOCK_SIZE, N_EMBD
    H, hs = NUM_HEADS, HEAD_SIZE

    key = jax.random.PRNGKey(0)
    kx, kq, kk, kv = jax.random.split(key, 4)

    x = jax.random.normal(kx, (B, T, C), dtype=jnp.float32)
    # Synthetic weights for each per-head Linear(n_embd, head_size, bias=False)
    wq = jax.random.normal(kq, (H, C, hs), dtype=jnp.float32) * 0.02
    wk = jax.random.normal(kk, (H, C, hs), dtype=jnp.float32) * 0.02
    wv = jax.random.normal(kv, (H, C, hs), dtype=jnp.float32) * 0.02

    out = multi_head_attention(x, wq, wk, wv)
    out = jax.block_until_ready(out)

    ref = _reference(x, wq, wk, wv)
    assert out.shape == (B, T, H * hs)
    assert jnp.allclose(out, ref, atol=1e-5, rtol=1e-5), "mismatch vs reference"

    print("KERNEL_OK")
</pallas_src>

<mosaic_0001>
module attributes {stable_mosaic.version = 11 : i64} {
  func.func @_mha_kernel(%arg0: i32, %arg1: memref<1x8x32xf32, #tpu.memory_space<vmem>>, %arg2: memref<32x96xf32, #tpu.memory_space<vmem>>, %arg3: memref<1x8x32xf32, #tpu.memory_space<vmem>>) attributes {dimension_semantics = [#tpu.dimension_semantics<parallel>], iteration_bounds = array<i64: 2>, scalar_prefetch = 0 : i64, scratch_operands = 0 : i64, tpu.core_type = #tpu.core_type<tc>, window_params = [{transform_indices = @transform_0, window_bounds = array<i64: 1, 8, 32>}, {pipeline_mode = #tpu.pipeline_mode<synchronous>, transform_indices = @transform_1, window_bounds = array<i64: 32, 96>}, {transform_indices = @transform_2, window_bounds = array<i64: 1, 8, 32>}]} {
    %c0 = arith.constant 0 : index
    %c0_0 = arith.constant 0 : index
    %c0_1 = arith.constant 0 : index
    %0 = vector.load %arg1[%c0, %c0_0, %c0_1] : memref<1x8x32xf32, #tpu.memory_space<vmem>>, vector<1x8x32xf32>
    %1 = vector.shape_cast %0 : vector<1x8x32xf32> to vector<8x32xf32>
    %c0_2 = arith.constant 0 : index
    %c0_3 = arith.constant 0 : index
    %2 = vector.load %arg2[%c0_2, %c0_3] : memref<32x96xf32, #tpu.memory_space<vmem>>, vector<32x96xf32>
    %cst = arith.constant dense<0.000000e+00> : vector<8x96xf32>
    %3 = tpu.matmul %1, %2, %cst {dimension_numbers = #tpu.dot_dimension_numbers<[1], [0], [0], [1], [0, 0, 1, 1], [], []>} : vector<8x32xf32>, vector<32x96xf32>, vector<8x96xf32> -> vector<8x96xf32>
    %4 = vector.extract_strided_slice %3 {offsets = [0, 0], sizes = [8, 32], strides = [1, 1]} : vector<8x96xf32> to vector<8x32xf32>
    %5 = vector.extract_strided_slice %3 {offsets = [0, 32], sizes = [8, 32], strides = [1, 1]} : vector<8x96xf32> to vector<8x32xf32>
    %6 = vector.extract_strided_slice %3 {offsets = [0, 64], sizes = [8, 32], strides = [1, 1]} : vector<8x96xf32> to vector<8x32xf32>
    %7 = tpu.iota {dimensions = array<i32: 0>} : vector<8x8xi32>
    %8 = tpu.iota {dimensions = array<i32: 1>} : vector<8x8xi32>
    %9 = arith.cmpi sge, %7, %8 : vector<8x8xi32>
    %10 = vector.extract_strided_slice %4 {offsets = [0, 0], sizes = [8, 8], strides = [1, 1]} : vector<8x32xf32> to vector<8x8xf32>
    %11 = vector.extract_strided_slice %5 {offsets = [0, 0], sizes = [8, 8], strides = [1, 1]} : vector<8x32xf32> to vector<8x8xf32>
    %12 = vector.extract_strided_slice %6 {offsets = [0, 0], sizes = [8, 8], strides = [1, 1]} : vector<8x32xf32> to vector<8x8xf32>
    %13 = tpu.transpose %11, [1, 0] : vector<8x8xf32> -> vector<8x8xf32>
    %cst_4 = arith.constant dense<0.000000e+00> : vector<8x8xf32>
    %14 = tpu.matmul %10, %13, %cst_4 {dimension_numbers = #tpu.dot_dimension_numbers<[1], [0], [0], [1], [0, 0, 1, 1], [], []>} : vector<8x8xf32>, vector<8x8xf32>, vector<8x8xf32> -> vector<8x8xf32>
    %cst_5 = arith.constant 0.353553385 : f32
    %15 = vector.broadcast %cst_5 : f32 to vector<8x8xf32>
    %16 = arith.mulf %14, %15 : vector<8x8xf32>
    %cst_6 = arith.constant -1.000000e+30 : f32
    %17 = vector.broadcast %cst_6 : f32 to vector<8x8xf32>
    %18 = arith.select %9, %16, %17 : vector<8x8xi1>, vector<8x8xf32>
    %cst_7 = arith.constant dense<0xFF800000> : vector<8xf32>
    %19 = vector.multi_reduction <maximumf>, %18, %cst_7 [1] : vector<8x8xf32> to vector<8xf32>
    %20 = vector.shape_cast %19 : vector<8xf32> to vector<8x1xf32>
    %21 = vector.broadcast %20 : vector<8x1xf32> to vector<8x8xf32>
    %22 = arith.subf %18, %21 : vector<8x8xf32>
    %23 = math.exp %22 : vector<8x8xf32>
    %cst_8 = arith.constant dense<0.000000e+00> : vector<8xf32>
    %24 = vector.multi_reduction <add>, %23, %cst_8 [1] : vector<8x8xf32> to vector<8xf32>
    %25 = vector.shape_cast %24 : vector<8xf32> to vector<8x1xf32>
    %cst_9 = arith.constant dense<0.000000e+00> : vector<8x8xf32>
    %26 = tpu.matmul %23, %12, %cst_9 {dimension_numbers = #tpu.dot_dimension_numbers<[1], [0], [0], [1], [0, 0, 1, 1], [], []>} : vector<8x8xf32>, vector<8x8xf32>, vector<8x8xf32> -> vector<8x8xf32>
    %27 = tpu.reciprocal %25 : vector<8x1xf32> -> vector<8x1xf32>
    %28 = vector.broadcast %27 : vector<8x1xf32> to vector<8x8xf32>
    %29 = arith.mulf %26, %28 : vector<8x8xf32>
    %30 = vector.extract_strided_slice %4 {offsets = [0, 8], sizes = [8, 8], strides = [1, 1]} : vector<8x32xf32> to vector<8x8xf32>
    %31 = vector.extract_strided_slice %5 {offsets = [0, 8], sizes = [8, 8], strides = [1, 1]} : vector<8x32xf32> to vector<8x8xf32>
    %32 = vector.extract_strided_slice %6 {offsets = [0, 8], sizes = [8, 8], strides = [1, 1]} : vector<8x32xf32> to vector<8x8xf32>
    %33 = tpu.transpose %31, [1, 0] : vector<8x8xf32> -> vector<8x8xf32>
    %cst_10 = arith.constant dense<0.000000e+00> : vector<8x8xf32>
    %34 = tpu.matmul %30, %33, %cst_10 {dimension_numbers = #tpu.dot_dimension_numbers<[1], [0], [0], [1], [0, 0, 1, 1], [], []>} : vector<8x8xf32>, vector<8x8xf32>, vector<8x8xf32> -> vector<8x8xf32>
    %cst_11 = arith.constant 0.353553385 : f32
    %35 = vector.broadcast %cst_11 : f32 to vector<8x8xf32>
    %36 = arith.mulf %34, %35 : vector<8x8xf32>
    %cst_12 = arith.constant -1.000000e+30 : f32
    %37 = vector.broadcast %cst_12 : f32 to vector<8x8xf32>
    %38 = arith.select %9, %36, %37 : vector<8x8xi1>, vector<8x8xf32>
    %cst_13 = arith.constant dense<0xFF800000> : vector<8xf32>
    %39 = vector.multi_reduction <maximumf>, %38, %cst_13 [1] : vector<8x8xf32> to vector<8xf32>
    %40 = vector.shape_cast %39 : vector<8xf32> to vector<8x1xf32>
    %41 = vector.broadcast %40 : vector<8x1xf32> to vector<8x8xf32>
    %42 = arith.subf %38, %41 : vector<8x8xf32>
    %43 = math.exp %42 : vector<8x8xf32>
    %cst_14 = arith.constant dense<0.000000e+00> : vector<8xf32>
    %44 = vector.multi_reduction <add>, %43, %cst_14 [1] : vector<8x8xf32> to vector<8xf32>
    %45 = vector.shape_cast %44 : vector<8xf32> to vector<8x1xf32>
    %cst_15 = arith.constant dense<0.000000e+00> : vector<8x8xf32>
    %46 = tpu.matmul %43, %32, %cst_15 {dimension_numbers = #tpu.dot_dimension_numbers<[1], [0], [0], [1], [0, 0, 1, 1], [], []>} : vector<8x8xf32>, vector<8x8xf32>, vector<8x8xf32> -> vector<8x8xf32>
    %47 = tpu.reciprocal %45 : vector<8x1xf32> -> vector<8x1xf32>
    %48 = vector.broadcast %47 : vector<8x1xf32> to vector<8x8xf32>
    %49 = arith.mulf %46, %48 : vector<8x8xf32>
    %50 = vector.extract_strided_slice %4 {offsets = [0, 16], sizes = [8, 8], strides = [1, 1]} : vector<8x32xf32> to vector<8x8xf32>
    %51 = vector.extract_strided_slice %5 {offsets = [0, 16], sizes = [8, 8], strides = [1, 1]} : vector<8x32xf32> to vector<8x8xf32>
    %52 = vector.extract_strided_slice %6 {offsets = [0, 16], sizes = [8, 8], strides = [1, 1]} : vector<8x32xf32> to vector<8x8xf32>
    %53 = tpu.transpose %51, [1, 0] : vector<8x8xf32> -> vector<8x8xf32>
    %cst_16 = arith.constant dense<0.000000e+00> : vector<8x8xf32>
    %54 = tpu.matmul %50, %53, %cst_16 {dimension_numbers = #tpu.dot_dimension_numbers<[1], [0], [0], [1], [0, 0, 1, 1], [], []>} : vector<8x8xf32>, vector<8x8xf32>, vector<8x8xf32> -> vector<8x8xf32>
    %cst_17 = arith.constant 0.353553385 : f32
    %55 = vector.broadcast %cst_17 : f32 to vector<8x8xf32>
    %56 = arith.mulf %54, %55 : vector<8x8xf32>
    %cst_18 = arith.constant -1.000000e+30 : f32
    %57 = vector.broadcast %cst_18 : f32 to vector<8x8xf32>
    %58 = arith.select %9, %56, %57 : vector<8x8xi1>, vector<8x8xf32>
    %cst_19 = arith.constant dense<0xFF800000> : vector<8xf32>
    %59 = vector.multi_reduction <maximumf>, %58, %cst_19 [1] : vector<8x8xf32> to vector<8xf32>
    %60 = vector.shape_cast %59 : vector<8xf32> to vector<8x1xf32>
    %61 = vector.broadcast %60 : vector<8x1xf32> to vector<8x8xf32>
    %62 = arith.subf %58, %61 : vector<8x8xf32>
    %63 = math.exp %62 : vector<8x8xf32>
    %cst_20 = arith.constant dense<0.000000e+00> : vector<8xf32>
    %64 = vector.multi_reduction <add>, %63, %cst_20 [1] : vector<8x8xf32> to vector<8xf32>
    %65 = vector.shape_cast %64 : vector<8xf32> to vector<8x1xf32>
    %cst_21 = arith.constant dense<0.000000e+00> : vector<8x8xf32>
    %66 = tpu.matmul %63, %52, %cst_21 {dimension_numbers = #tpu.dot_dimension_numbers<[1], [0], [0], [1], [0, 0, 1, 1], [], []>} : vector<8x8xf32>, vector<8x8xf32>, vector<8x8xf32> -> vector<8x8xf32>
    %67 = tpu.reciprocal %65 : vector<8x1xf32> -> vector<8x1xf32>
    %68 = vector.broadcast %67 : vector<8x1xf32> to vector<8x8xf32>
    %69 = arith.mulf %66, %68 : vector<8x8xf32>
    %70 = vector.extract_strided_slice %4 {offsets = [0, 24], sizes = [8, 8], strides = [1, 1]} : vector<8x32xf32> to vector<8x8xf32>
    %71 = vector.extract_strided_slice %5 {offsets = [0, 24], sizes = [8, 8], strides = [1, 1]} : vector<8x32xf32> to vector<8x8xf32>
    %72 = vector.extract_strided_slice %6 {offsets = [0, 24], sizes = [8, 8], strides = [1, 1]} : vector<8x32xf32> to vector<8x8xf32>
    %73 = tpu.transpose %71, [1, 0] : vector<8x8xf32> -> vector<8x8xf32>
    %cst_22 = arith.constant dense<0.000000e+00> : vector<8x8xf32>
    %74 = tpu.matmul %70, %73, %cst_22 {dimension_numbers = #tpu.dot_dimension_numbers<[1], [0], [0], [1], [0, 0, 1, 1], [], []>} : vector<8x8xf32>, vector<8x8xf32>, vector<8x8xf32> -> vector<8x8xf32>
    %cst_23 = arith.constant 0.353553385 : f32
    %75 = vector.broadcast %cst_23 : f32 to vector<8x8xf32>
    %76 = arith.mulf %74, %75 : vector<8x8xf32>
    %cst_24 = arith.constant -1.000000e+30 : f32
    %77 = vector.broadcast %cst_24 : f32 to vector<8x8xf32>
    %78 = arith.select %9, %76, %77 : vector<8x8xi1>, vector<8x8xf32>
    %cst_25 = arith.constant dense<0xFF800000> : vector<8xf32>
    %79 = vector.multi_reduction <maximumf>, %78, %cst_25 [1] : vector<8x8xf32> to vector<8xf32>
    %80 = vector.shape_cast %79 : vector<8xf32> to vector<8x1xf32>
    %81 = vector.broadcast %80 : vector<8x1xf32> to vector<8x8xf32>
    %82 = arith.subf %78, %81 : vector<8x8xf32>
    %83 = math.exp %82 : vector<8x8xf32>
    %cst_26 = arith.constant dense<0.000000e+00> : vector<8xf32>
    %84 = vector.multi_reduction <add>, %83, %cst_26 [1] : vector<8x8xf32> to vector<8xf32>
    %85 = vector.shape_cast %84 : vector<8xf32> to vector<8x1xf32>
    %cst_27 = arith.constant dense<0.000000e+00> : vector<8x8xf32>
    %86 = tpu.matmul %83, %72, %cst_27 {dimension_numbers = #tpu.dot_dimension_numbers<[1], [0], [0], [1], [0, 0, 1, 1], [], []>} : vector<8x8xf32>, vector<8x8xf32>, vector<8x8xf32> -> vector<8x8xf32>
    %87 = tpu.reciprocal %85 : vector<8x1xf32> -> vector<8x1xf32>
    %88 = vector.broadcast %87 : vector<8x1xf32> to vector<8x8xf32>
    %89 = arith.mulf %86, %88 : vector<8x8xf32>
    %90 = tpu.concatenate %29, %49, %69, %89 in 1 : vector<8x8xf32>, vector<8x8xf32>, vector<8x8xf32>, vector<8x8xf32> -> vector<8x32xf32>
    %c0_28 = arith.constant 0 : index
    %c0_29 = arith.constant 0 : index
    %c0_30 = arith.constant 0 : index
    %91 = vector.load %arg3[%c0_28, %c0_29, %c0_30] : memref<1x8x32xf32, #tpu.memory_space<vmem>>, vector<1x8x32xf32>
    %92 = vector.shape_cast %91 : vector<1x8x32xf32> to vector<8x32xf32>
    %93 = vector.shape_cast %90 : vector<8x32xf32> to vector<1x8x32xf32>
    tpu.vector_store %arg3[%c0_28, %c0_29, %c0_30], %93 {strides = array<i32>} : memref<1x8x32xf32, #tpu.memory_space<vmem>>, vector<1x8x32xf32>,
    return
  }
  func.func @transform_0(%arg0: i32) -> (i32, i32, i32) {
    %c0_i32 = arith.constant 0 : i32
    %c0_i32_0 = arith.constant 0 : i32
    %c0_i32_1 = arith.constant 0 : i32
    return %arg0, %c0_i32, %c0_i32_0 : i32, i32, i32
  }
  func.func @transform_1(%arg0: i32) -> (i32, i32) {
    %c0_i32 = arith.constant 0 : i32
    %c0_i32_0 = arith.constant 0 : i32
    %c0_i32_1 = arith.constant 0 : i32
    return %c0_i32, %c0_i32_0 : i32, i32
  }
  func.func @transform_2(%arg0: i32) -> (i32, i32, i32) {
    %c0_i32 = arith.constant 0 : i32
    %c0_i32_0 = arith.constant 0 : i32
    %c0_i32_1 = arith.constant 0 : i32
    return %arg0, %c0_i32, %c0_i32_0 : i32, i32, i32
  }
}

</mosaic_0001>

<llo_original>
// kernel: tpu_custom_call.1
$region0: #{tpu_custom_call.1}
  #allocation0 [shape = 'u32[]', space=smem, size = 0x4, offset = 0x4, fixed_abs, tag = 'smem constant byte address 0x4 - core index']
  #allocation1 [shape = 'u32[144,128]{1,0:T(1,128)}', space=vmem, size = 0x12000, scoped, tag = 'internal scratch']
  %s0 = inlined_call_operand.hbm [shape: f32[2,8,32], index: 0, kind: input, shape index: {}]
  %s1 = inlined_call_operand.hbm [shape: f32[32,96], index: 1, kind: input, shape index: {}]
  %s2 = inlined_call_operand.hbm [shape: f32[2,8,32], index: 2, kind: output, shape index: {}]
  %s3 = sld [smem:[#allocation0]]
  $region49: #{tpu_custom_call.1} parent=0
    _
  %s5 = ssub.s32 1, %s3
  %s6 = scalar_select 0, %s5, %s3
  $region1: #{tpu_custom_call.1} parent=0
    #allocation2 [shape = 'u8[8192]{0}', space=vmem, size = 0x2000, scoped, tag = 'input window, operand 0']
    #allocation3 [shape = 's32[2]{0}', space=sflag, size = 0x8, scoped, tag = 'scoped memory for tpu_custom_call.1']
    #allocation4 [shape = 's32[2]{0}', space=sflag, size = 0x8, scoped, tag = 'scoped memory for tpu_custom_call.1']
    #allocation5 [shape = 'u8[16384]{0}', space=vmem, size = 0x4000, scoped, tag = 'input window, operand 1, single buffered']
    #allocation6 [shape = 's32[1]{0}', space=sflag, size = 0x4, scoped, tag = 'scoped memory for tpu_custom_call.1']
    #allocation7 [shape = 'u8[8192]{0}', space=vmem, size = 0x2000, scoped, tag = 'output window, operand 0']
    %7 = vsyncpa [#allocation3], 0
    %s8 = scalar_lea.sflag [#allocation3], 1
    %9 = vsyncpa %s8, 0
    %10 = vsyncpa [#allocation6], 0
    %11 = vsyncpa [#allocation4], 0
    %s12 = scalar_lea.sflag [#allocation4], 1
    %13 = vsyncpa %s12, 0
    loop: start=0, step=1, limit=4
    $region2: #{tpu_custom_call.1} parent=1 // loop_pre_header
      _
    $region3: #{tpu_custom_call.1} parent=1 // loop_header
      %s15 = sphi 0, %s19
      %p16 = scmp.ge.s32.totalorder %s15, 4
      %s25 = sphi 0, %s27
      %s28 = sphi 0, %s25
      %s29 = sphi 0, %s28
      %s45 = sphi 0, %s29
      %s49 = sphi 0, %s49
      %s51 = sphi 0, %s49
      %s52 = sphi 0, %s51
      %s66 = sphi 0, %s52
      %s72 = sphi 0, %s74
      %s75 = sphi 0, %s72
      %s76 = sphi 0, %s75
      %s92 = sphi 0, %s76
    $region4: #{tpu_custom_call.1} parent=1 // loop_header_branch
      %18 = sbr.rel (%p16) target = $region8
    $region5: #{tpu_custom_call.1} parent=1 // loop_body
      %s20 = ssub.s32 %s15, 1
      %s21 = ssub.s32 %s15, 2
      %s22 = sadd.s32 %s15, 1
      %s23 = ssub.s32 %s15, %s22
      %p24 = scmp.eq.s32.totalorder %s23, 0
      %s26 = sadd.s32 %s25, 1
      %s27 = scalar_select %p24, %s25, %s26
      %p30 = pneg %p24
      %p31 = scmp.eq.s32.totalorder %s15, 1
      %p32 = por %p30, %p31
      %p33 = scmp.ne.s32.totalorder %s25, %s28
      %p34 = scmp.eq.s32.totalorder %s15, 0
      %p35 = por %p33, %p34
      %p36 = scmp.ne.s32.totalorder %s25, %s28
      %p37 = scmp.eq.s32.totalorder %s20, 1
      %p38 = por %p36, %p37
      %p39 = scmp.ne.s32.totalorder %s28, %s29
      %p40 = scmp.eq.s32.totalorder %s20, 0
      %p41 = por %p39, %p40
      %p42 = scmp.ne.s32.totalorder %s28, %s29
      %p43 = scmp.eq.s32.totalorder %s21, 1
      %p44 = por %p42, %p43
      %p46 = scmp.ne.s32.totalorder %s29, %s45
      %p47 = scmp.eq.s32.totalorder %s21, 0
      %p48 = por %p46, %p47
      %s50 = sadd.s32 %s49, 1
      %p53 = scmp.eq.s32.totalorder %s15, 1
      %p54 = scmp.ne.s32.totalorder %s49, %s51
      %p55 = scmp.eq.s32.totalorder %s15, 0
      %p56 = por %p54, %p55
      %p57 = scmp.ne.s32.totalorder %s49, %s51
      %p58 = scmp.eq.s32.totalorder %s20, 1
      %p59 = por %p57, %p58
      %p60 = scmp.ne.s32.totalorder %s51, %s52
      %p61 = scmp.eq.s32.totalorder %s20, 0
      %p62 = por %p60, %p61
      %p63 = scmp.ne.s32.totalorder %s51, %s52
      %p64 = scmp.eq.s32.totalorder %s21, 1
      %p65 = por %p63, %p64
      %p67 = scmp.ne.s32.totalorder %s52, %s66
      %p68 = scmp.eq.s32.totalorder %s21, 0
      %p69 = por %p67, %p68
      %s70 = ssub.s32 %s15, %s22
      %p71 = scmp.eq.s32.totalorder %s70, 0
      %s73 = sadd.s32 %s72, 1
      %s74 = scalar_select %p71, %s72, %s73
      %p77 = pneg %p71
      %p78 = scmp.eq.s32.totalorder %s15, 1
      %p79 = por %p77, %p78
      %p80 = scmp.ne.s32.totalorder %s72, %s75
      %p81 = scmp.eq.s32.totalorder %s15, 0
      %p82 = por %p80, %p81
      %p83 = scmp.ne.s32.totalorder %s72, %s75
      %p84 = scmp.eq.s32.totalorder %s20, 1
      %p85 = por %p83, %p84
      %p86 = scmp.ne.s32.totalorder %s75, %s76
      %p87 = scmp.eq.s32.totalorder %s20, 0
      %p88 = por %p86, %p87
      %p89 = scmp.ne.s32.totalorder %s75, %s76
      %p90 = scmp.eq.s32.totalorder %s21, 1
      %p91 = por %p89, %p90
      %p93 = scmp.ne.s32.totalorder %s76, %s92
      %p94 = scmp.eq.s32.totalorder %s21, 0
      %p95 = por %p93, %p94
      %p96 = scmp.le.s32.totalorder 1, %s15
      %p97 = scmp.lt.s32.totalorder %s15, 3
      %p98 = pnand %p96, %p97
      %p99 = pneg %p98
      // Predicated region
      $region9: #{tpu_custom_call.1} parent=5 // pred_check
        _
      $region10: #{tpu_custom_call.1} parent=5 // pred_check_branch
        %101 = sbr.rel (%p98) target = $region12
      $region11: #{tpu_custom_call.1} parent=5 // pred_region
        %s102 = ssub.s32 %s15, 1
        // Predicated region
        $region13: #{tpu_custom_call.1} parent=11 // pred_check
          %p103 = pneg %p62
        $region14: #{tpu_custom_call.1} parent=11 // pred_check_branch
          %105 = sbr.rel (%p103) target = $region16
        $region15: #{tpu_custom_call.1} parent=11 // pred_region
          %s107 = ssub.s32 512, 512
          %108 = vsyncadd [#allocation6], %s107
          %s109 = sshll.u32 [#allocation5], 4
          %s110 = int_to_ptr.vmem [resolvable:$true] %s109
          %115 = dma.hbm_to_vmem [thread:$0]  %s1, 512, %s110, [#allocation6], 128, 128, 8
        $region16: #{tpu_custom_call.1} parent=11 // pred_fallthru
          _
      $region12: #{tpu_custom_call.1} parent=5 // pred_fallthru
        _
      %p116 = scmp.lt.s32.totalorder %s15, 2
      // Predicated region
      $region17: #{tpu_custom_call.1} parent=5 // pred_check
        %p117 = pneg %p116
      $region18: #{tpu_custom_call.1} parent=5 // pred_check_branch
        %119 = sbr.rel (%p117) target = $region20
      $region19: #{tpu_custom_call.1} parent=5 // pred_region
        // Predicated region
        $region21: #{tpu_custom_call.1} parent=19 // pred_check
          %p120 = pneg %p35
        $region22: #{tpu_custom_call.1} parent=19 // pred_check_branch
          %122 = sbr.rel (%p120) target = $region24
        $region23: #{tpu_custom_call.1} parent=19 // pred_region
          %s123 = sand.u32 %s25, 1
          %s124 = scalar_lea.sflag [#allocation3], %s123
          %s125 = sand.u32 %s25, 1
          %s126 = smul.addr %s125, 8
          %s127 = scalar_lea.vmem [#allocation2], %s126
          %s129 = ssub.s32 128, 128
          %130 = vsyncadd %s124, %s129
          %s131 = smul.addr %s15, 128
          %s132 = scalar_lea.hbm %s0, %s131
          %s134 = sshll.u32 %s127, 4
          %s135 = int_to_ptr.vmem [resolvable:$true] %s134
          %137 = dma.hbm_to_vmem [thread:$0]  %s132, 128, %s135, %s124
        $region24: #{tpu_custom_call.1} parent=19 // pred_fallthru
          _
      $region20: #{tpu_custom_call.1} parent=5 // pred_fallthru
        _
      %p138 = scmp.le.s32.totalorder 1, %s15
      %p139 = scmp.lt.s32.totalorder %s15, 3
      %p140 = pnand %p138, %p139
      %p141 = pneg %p140
      // Predicated region
      $region25: #{tpu_custom_call.1} parent=5 // pred_check
        _
      $region26: #{tpu_custom_call.1} parent=5 // pred_check_branch
        %143 = sbr.rel (%p140) target = $region28
      $region27: #{tpu_custom_call.1} parent=5 // pred_region
        %s144 = ssub.s32 %s15, 1
        %s145 = sand.u32 %s28, 1
        %s146 = scalar_lea.sflag [#allocation3], %s145
        %s147 = sand.u32 %s28, 1
        %s148 = smul.addr %s147, 8
        %s149 = scalar_lea.vmem [#allocation2], %s148
        // Predicated region
        $region29: #{tpu_custom_call.1} parent=27 // pred_check
          %p150 = pneg %p41
        $region30: #{tpu_custom_call.1} parent=27 // pred_check_branch
          %152 = sbr.rel (%p150) target = $region32
        $region31: #{tpu_custom_call.1} parent=27 // pred_region
          %153 = dma.done %s146, 128
        $region32: #{tpu_custom_call.1} parent=27 // pred_fallthru
          _
        // Predicated region
        $region33: #{tpu_custom_call.1} parent=27 // pred_check
          %p154 = pneg %p62
        $region34: #{tpu_custom_call.1} parent=27 // pred_check_branch
          %156 = sbr.rel (%p154) target = $region36
        $region35: #{tpu_custom_call.1} parent=27 // pred_region
          %157 = dma.done [#allocation6], 512
        $region36: #{tpu_custom_call.1} parent=27 // pred_fallthru
          _
        %s158 = sand.u32 %s28, 1
        %s159 = scalar_lea.sflag [#allocation3], %s158
        %s160 = sand.u32 %s28, 1
        %s161 = smul.addr %s160, 8
        %s162 = scalar_lea.vmem [#allocation2], %s161
        %p163 = pneg %p41
        %p164 = pneg %p38
        %p165 = pneg %p62
        %p166 = pneg %p59
        %p167 = pneg %p88
        %p168 = pneg %p85
        %s169 = sand.u32 %s75, 1
        %s170 = scalar_lea.sflag [#allocation4], %s169
        %s171 = sand.u32 %s75, 1
        %s172 = smul.addr %s171, 8
        %s173 = scalar_lea.vmem [#allocation7], %s172
        %v174 = vld [vmem:[%s149] sm:$0xff]
        %v175 = vld [vmem:[#allocation5] sm:$0xff]
        %v176 = vld [vmem:[#allocation5 + $0x8] sm:$0xff]
        %v177 = vld [vmem:[#allocation5 + $0x10] sm:$0xff]
        %v178 = vld [vmem:[#allocation5 + $0x18] sm:$0xff]
        %vm179 = vcmask 261120
        %v181 = vsel %vm179, %v174, 0
        %183 = vmatprep.subr.mxu0 0.0
        %184 = vmatpush1.msra.mxu0 %v175
        %185 = vmatprep.subr.mxu0 0.0
        %186 = vmatpush1.msra.mxu0 %v176
        %187 = vmatprep.subr.mxu0 0.0
        %188 = vmatpush1.msra.mxu0 %v177
        %189 = vmatprep.subr.mxu0 0.0
        %190 = vmatpush1.msra.mxu0 %v178
        %191 = vmatprep.subr.mxu0 0.0
        %192 = vmatpush1.msra.mxu0 0.0
        %193 = vmatprep.subr.mxu0 0.0
        %194 = vmatpush1.msra.mxu0 0.0
        %195 = vmatprep.subr.mxu0 0.0
        %196 = vmatpush1.msra.mxu0 0.0
        %197 = vmatprep.subr.mxu0 0.0
        %198 = vmatpush1.msra.mxu0 0.0
        %199 = vmatprep.subr.mxu0 0.0
        %200 = vmatpush1.msra.mxu0 0.0
        %201 = vmatprep.subr.mxu0 0.0
        %202 = vmatpush1.msra.mxu0 0.0
        %203 = vmatprep.subr.mxu0 0.0
        %204 = vmatpush1.msra.mxu0 0.0
        %205 = vmatprep.subr.mxu0 0.0
        %206 = vmatpush1.msra.mxu0 0.0
        %207 = vmatprep.subr.mxu0 0.0
        %208 = vmatpush1.msra.mxu0 0.0
        %209 = vmatprep.subr.mxu0 0.0
        %210 = vmatpush1.msra.mxu0 0.0
        %211 = vmatprep.subr.mxu0 0.0
        %212 = vmatpush1.msra.mxu0 0.0
        %213 = vmatprep.subr.mxu0 0.0
        %214 = vmatpush1.msra.mxu0 0.0
        %215 = vmatprep.subr.mxu0 0.0
        %216 = vmatpush1.msra.mxu0 0.0
        %217 = vmatprep.subr.mxu0 0.0
        %218 = vmatpush1.msra.mxu0 0.0
        %219 = vmatprep.subr.mxu0 0.0
        %220 = vmatpush1.msra.mxu0 0.0
        %221 = vmatprep.subr.mxu0 0.0
        %222 = vmatpush1.msra.mxu0 0.0
        %223 = vmatprep.subr.mxu0 0.0
        %224 = vmatpush1.msra.mxu0 0.0
        %225 = vmatprep.subr.mxu0 0.0
        %226 = vmatpush1.msra.mxu0 0.0
        %227 = vmatprep.subr.mxu0 0.0
        %228 = vmatpush1.msra.mxu0 0.0
        %229 = vmatprep.subr.mxu0 0.0
        %230 = vmatpush1.msra.mxu0 0.0
        %231 = vmatprep.subr.mxu0 0.0
        %232 = vmatpush1.msra.mxu0 0.0
        %233 = vmatprep.subr.mxu0 0.0
        %234 = vmatpush1.msra.mxu0 0.0
        %235 = vmatprep.subr.mxu0 0.0
        %236 = vmatpush1.msra.mxu0 0.0
        %237 = vmatprep.subr.mxu0 0.0
        %238 = vmatpush1.msra.mxu0 0.0
        %239 = vmatprep.subr.mxu0 0.0
        %240 = vmatpush1.msra.mxu0 0.0
        %241 = vmatprep.subr.mxu0 0.0
        %242 = vmatpush1.msra.mxu0 0.0
        %243 = vmatprep.subr.mxu0 0.0
        %244 = vmatpush1.msra.mxu0 0.0
        %245 = vmatprep.subr.mxu0 0.0
        %246 = vmatpush1.msra.mxu0 0.0
        %247 = vmatprep.mubr.f32.mxu0 0.0
        %248 = vmatmul.mubr.f32.gmra.mrb[0].mxu0 %v181
        %v249 = vpop.f32.mrb[0].mxu0
        %v250 = vadd.f32 0.0, %v249
        %v251 = vpop.f32.mrb[0].mxu0
        %252 = vdwg.mxu0
        %v253 = vlaneseq
        %v254 = vshrl.u32 %v253, 7
        %v255 = vlaneseq
        %v256 = vand.u32 %v255, 127
        %vm257 = vcmp.ge.s32.totalorder %v254, %v256
        %259 = vrot.lane.b32.xlu0 %v250, 96
        %v260 = vpop.permute.xlu0 %259
        %vm261 = vcmask 64512
        %v262 = vsel %vm261, %v250, 0
        %v264 = vsel %vm261, %v260, 0
        %266 = vmatprep.subr.mxu0 0.0
        %267 = vmatpush1.xpose.msra.mxu0 %v264
        %268 = vmatprep.subr.mxu0 0.0
        %269 = vmatpush1.xpose.msra.mxu0 0.0
        %270 = vmatprep.subr.mxu0 0.0
        %271 = vmatpush1.xpose.msra.mxu0 0.0
        %272 = vmatprep.subr.mxu0 0.0
        %273 = vmatpush1.xpose.msra.mxu0 0.0
        %274 = vmatprep.subr.mxu0 0.0
        %275 = vmatpush1.xpose.msra.mxu0 0.0
        %276 = vmatprep.subr.mxu0 0.0
        %277 = vmatpush1.xpose.msra.mxu0 0.0
        %278 = vmatprep.subr.mxu0 0.0
        %279 = vmatpush1.xpose.msra.mxu0 0.0
        %280 = vmatprep.subr.mxu0 0.0
        %281 = vmatpush1.xpose.msra.mxu0 0.0
        %282 = vmatprep.subr.mxu0 0.0
        %283 = vmatpush1.xpose.msra.mxu0 0.0
        %284 = vmatprep.subr.mxu0 0.0
        %285 = vmatpush1.xpose.msra.mxu0 0.0
        %286 = vmatprep.subr.mxu0 0.0
        %287 = vmatpush1.xpose.msra.mxu0 0.0
        %288 = vmatprep.subr.mxu0 0.0
        %289 = vmatpush1.xpose.msra.mxu0 0.0
        %290 = vmatprep.subr.mxu0 0.0
        %291 = vmatpush1.xpose.msra.mxu0 0.0
        %292 = vmatprep.subr.mxu0 0.0
        %293 = vmatpush1.xpose.msra.mxu0 0.0
        %294 = vmatprep.subr.mxu0 0.0
        %295 = vmatpush1.xpose.msra.mxu0 0.0
        %296 = vmatprep.subr.mxu0 0.0
        %297 = vmatpush1.xpose.msra.mxu0 0.0
        %298 = vmatprep.subr.mxu0 0.0
        %299 = vmatpush1.xpose.msra.mxu0 0.0
        %300 = vmatprep.subr.mxu0 0.0
        %301 = vmatpush1.xpose.msra.mxu0 0.0
        %302 = vmatprep.subr.mxu0 0.0
        %303 = vmatpush1.xpose.msra.mxu0 0.0
        %304 = vmatprep.subr.mxu0 0.0
        %305 = vmatpush1.xpose.msra.mxu0 0.0
        %306 = vmatprep.subr.mxu0 0.0
        %307 = vmatpush1.xpose.msra.mxu0 0.0
        %308 = vmatprep.subr.mxu0 0.0
        %309 = vmatpush1.xpose.msra.mxu0 0.0
        %310 = vmatprep.subr.mxu0 0.0
        %311 = vmatpush1.xpose.msra.mxu0 0.0
        %312 = vmatprep.subr.mxu0 0.0
        %313 = vmatpush1.xpose.msra.mxu0 0.0
        %314 = vmatprep.subr.mxu0 0.0
        %315 = vmatpush1.xpose.msra.mxu0 0.0
        %316 = vmatprep.subr.mxu0 0.0
        %317 = vmatpush1.xpose.msra.mxu0 0.0
        %318 = vmatprep.subr.mxu0 0.0
        %319 = vmatpush1.xpose.msra.mxu0 0.0
        %320 = vmatprep.subr.mxu0 0.0
        %321 = vmatpush1.xpose.msra.mxu0 0.0
        %322 = vmatprep.subr.mxu0 0.0
        %323 = vmatpush1.xpose.msra.mxu0 0.0
        %324 = vmatprep.subr.mxu0 0.0
        %325 = vmatpush1.xpose.msra.mxu0 0.0
        %326 = vmatprep.subr.mxu0 0.0
        %327 = vmatpush1.xpose.msra.mxu0 0.0
        %328 = vmatprep.subr.mxu0 0.0
        %329 = vmatpush1.xpose.msra.mxu0 0.0
        %330 = vmatprep.mubr.f32.mxu0 0.0
        %331 = vmatmul.mubr.f32.gmra.mrb[0].mxu0 %v262
        %v332 = vpop.f32.mrb[0].mxu0
        %v333 = vadd.f32 0.0, %v332
        %v334 = vpop.f32.mrb[0].mxu0
        %335 = vdwg.mxu0
        %v336 = vmul.f32 %v333, 0.35355338
        %v337 = vsel %vm257, %v336, -1e+30
        %v338 = vsel %vm261, %v337, -inf
        %339 = vmax.xlane.f32.xlu0 %v338
        %v340 = vpop.xlane.xlu0 %339
        %v341 = vsub.f32 %v337, %v340
        %v342 = vmul.f32 %v341, 1.442695
        %v343 = vpow.pop %v342
        %v344 = vsel %vm261, %v343, 0.0
        %345 = vadd.xlane.f32.xlu0 %v344
        %v346 = vpop.xlane.xlu0 %345
        %347 = vrot.lane.b32.xlu0 %v250, 64
        %v348 = vpop.permute.xlu0 %347
        %v351 = vsel %vm261, %v343, 0
        %353 = vmatprep.subr.mxu0 0.0
        %354 = vmatpush1.msra.mxu0 %v348
        %355 = vmatprep.subr.mxu0 0.0
        %356 = vmatpush1.msra.mxu0 0.0
        %357 = vmatprep.subr.mxu0 0.0
        %358 = vmatpush1.msra.mxu0 0.0
        %359 = vmatprep.subr.mxu0 0.0
        %360 = vmatpush1.msra.mxu0 0.0
        %361 = vmatprep.subr.mxu0 0.0
        %362 = vmatpush1.msra.mxu0 0.0
        %363 = vmatprep.subr.mxu0 0.0
        %364 = vmatpush1.msra.mxu0 0.0
        %365 = vmatprep.subr.mxu0 0.0
        %366 = vmatpush1.msra.mxu0 0.0
        %367 = vmatprep.subr.mxu0 0.0
        %368 = vmatpush1.msra.mxu0 0.0
        %369 = vmatprep.subr.mxu0 0.0
        %370 = vmatpush1.msra.mxu0 0.0
        %371 = vmatprep.subr.mxu0 0.0
        %372 = vmatpush1.msra.mxu0 0.0
        %373 = vmatprep.subr.mxu0 0.0
        %374 = vmatpush1.msra.mxu0 0.0
        %375 = vmatprep.subr.mxu0 0.0
        %376 = vmatpush1.msra.mxu0 0.0
        %377 = vmatprep.subr.mxu0 0.0
        %378 = vmatpush1.msra.mxu0 0.0
        %379 = vmatprep.subr.mxu0 0.0
        %380 = vmatpush1.msra.mxu0 0.0
        %381 = vmatprep.subr.mxu0 0.0
        %382 = vmatpush1.msra.mxu0 0.0
        %383 = vmatprep.subr.mxu0 0.0
        %384 = vmatpush1.msra.mxu0 0.0
        %385 = vmatprep.subr.mxu0 0.0
        %386 = vmatpush1.msra.mxu0 0.0
        %387 = vmatprep.subr.mxu0 0.0
        %388 = vmatpush1.msra.mxu0 0.0
        %389 = vmatprep.subr.mxu0 0.0
        %390 = vmatpush1.msra.mxu0 0.0
        %391 = vmatprep.subr.mxu0 0.0
        %392 = vmatpush1.msra.mxu0 0.0
        %393 = vmatprep.subr.mxu0 0.0
        %394 = vmatpush1.msra.mxu0 0.0
        %395 = vmatprep.subr.mxu0 0.0
        %396 = vmatpush1.msra.mxu0 0.0
        %397 = vmatprep.subr.mxu0 0.0
        %398 = vmatpush1.msra.mxu0 0.0
        %399 = vmatprep.subr.mxu0 0.0
        %400 = vmatpush1.msra.mxu0 0.0
        %401 = vmatprep.subr.mxu0 0.0
        %402 = vmatpush1.msra.mxu0 0.0
        %403 = vmatprep.subr.mxu0 0.0
        %404 = vmatpush1.msra.mxu0 0.0
        %405 = vmatprep.subr.mxu0 0.0
        %406 = vmatpush1.msra.mxu0 0.0
        %407 = vmatprep.subr.mxu0 0.0
        %408 = vmatpush1.msra.mxu0 0.0
        %409 = vmatprep.subr.mxu0 0.0
        %410 = vmatpush1.msra.mxu0 0.0
        %411 = vmatprep.subr.mxu0 0.0
        %412 = vmatpush1.msra.mxu0 0.0
        %413 = vmatprep.subr.mxu0 0.0
        %414 = vmatpush1.msra.mxu0 0.0
        %415 = vmatprep.subr.mxu0 0.0
        %416 = vmatpush1.msra.mxu0 0.0
        %417 = vmatprep.mubr.f32.mxu0 0.0
        %418 = vmatmul.mubr.f32.gmra.mrb[0].mxu0 %v351
        %v419 = vpop.f32.mrb[0].mxu0
        %v420 = vadd.f32 0.0, %v419
        %v421 = vpop.f32.mrb[0].mxu0
        %422 = vdwg.mxu0
        %v423 = vrcp.pop %v346
        %v424 = vmul.f32 %v420, %v423
        %425 = vrot.lane.b32.xlu0 %v250, 120
        %v426 = vpop.permute.xlu0 %425
        %427 = vrot.lane.b32.xlu0 %v250, 88
        %v428 = vpop.permute.xlu0 %427
        %v429 = vsel %vm261, %v426, 0
        %v431 = vsel %vm261, %v428, 0
        %433 = vmatprep.subr.mxu0 0.0
        %434 = vmatpush1.xpose.msra.mxu0 %v431
        %435 = vmatprep.subr.mxu0 0.0
        %436 = vmatpush1.xpose.msra.mxu0 0.0
        %437 = vmatprep.subr.mxu0 0.0
        %438 = vmatpush1.xpose.msra.mxu0 0.0
        %439 = vmatprep.subr.mxu0 0.0
        %440 = vmatpush1.xpose.msra.mxu0 0.0
        %441 = vmatprep.subr.mxu0 0.0
        %442 = vmatpush1.xpose.msra.mxu0 0.0
        %443 = vmatprep.subr.mxu0 0.0
        %444 = vmatpush1.xpose.msra.mxu0 0.0
        %445 = vmatprep.subr.mxu0 0.0
        %446 = vmatpush1.xpose.msra.mxu0 0.0
        %447 = vmatprep.subr.mxu0 0.0
        %448 = vmatpush1.xpose.msra.mxu0 0.0
        %449 = vmatprep.subr.mxu0 0.0
        %450 = vmatpush1.xpose.msra.mxu0 0.0
        %451 = vmatprep.subr.mxu0 0.0
        %452 = vmatpush1.xpose.msra.mxu0 0.0
        %453 = vmatprep.subr.mxu0 0.0
        %454 = vmatpush1.xpose.msra.mxu0 0.0
        %455 = vmatprep.subr.mxu0 0.0
        %456 = vmatpush1.xpose.msra.mxu0 0.0
        %457 = vmatprep.subr.mxu0 0.0
        %458 = vmatpush1.xpose.msra.mxu0 0.0
        %459 = vmatprep.subr.mxu0 0.0
        %460 = vmatpush1.xpose.msra.mxu0 0.0
        %461 = vmatprep.subr.mxu0 0.0
        %462 = vmatpush1.xpose.msra.mxu0 0.0
        %463 = vmatprep.subr.mxu0 0.0
        %464 = vmatpush1.xpose.msra.mxu0 0.0
        %465 = vmatprep.subr.mxu0 0.0
        %466 = vmatpush1.xpose.msra.mxu0 0.0
        %467 = vmatprep.subr.mxu0 0.0
        %468 = vmatpush1.xpose.msra.mxu0 0.0
        %469 = vmatprep.subr.mxu0 0.0
        %470 = vmatpush1.xpose.msra.mxu0 0.0
        %471 = vmatprep.subr.mxu0 0.0
        %472 = vmatpush1.xpose.msra.mxu0 0.0
        %473 = vmatprep.subr.mxu0 0.0
        %474 = vmatpush1.xpose.msra.mxu0 0.0
        %475 = vmatprep.subr.mxu0 0.0
        %476 = vmatpush1.xpose.msra.mxu0 0.0
        %477 = vmatprep.subr.mxu0 0.0
        %478 = vmatpush1.xpose.msra.mxu0 0.0
        %479 = vmatprep.subr.mxu0 0.0
        %480 = vmatpush1.xpose.msra.mxu0 0.0
        %481 = vmatprep.subr.mxu0 0.0
        %482 = vmatpush1.xpose.msra.mxu0 0.0
        %483 = vmatprep.subr.mxu0 0.0
        %484 = vmatpush1.xpose.msra.mxu0 0.0
        %485 = vmatprep.subr.mxu0 0.0
        %486 = vmatpush1.xpose.msra.mxu0 0.0
        %487 = vmatprep.subr.mxu0 0.0
        %488 = vmatpush1.xpose.msra.mxu0 0.0
        %489 = vmatprep.subr.mxu0 0.0
        %490 = vmatpush1.xpose.msra.mxu0 0.0
        %491 = vmatprep.subr.mxu0 0.0
        %492 = vmatpush1.xpose.msra.mxu0 0.0
        %493 = vmatprep.subr.mxu0 0.0
        %494 = vmatpush1.xpose.msra.mxu0 0.0
        %495 = vmatprep.subr.mxu0 0.0
        %496 = vmatpush1.xpose.msra.mxu0 0.0
        %497 = vmatprep.mubr.f32.mxu0 0.0
        %498 = vmatmul.mubr.f32.gmra.mrb[0].mxu0 %v429
        %v499 = vpop.f32.mrb[0].mxu0
        %v500 = vadd.f32 0.0, %v499
        %v501 = vpop.f32.mrb[0].mxu0
        %502 = vdwg.mxu0
        %v503 = vmul.f32 %v500, 0.35355338
        %v504 = vsel %vm257, %v503, -1e+30
        %v505 = vsel %vm261, %v504, -inf
        %506 = vmax.xlane.f32.xlu0 %v505
        %v507 = vpop.xlane.xlu0 %506
        %v508 = vsub.f32 %v504, %v507
        %v509 = vmul.f32 %v508, 1.442695
        %v510 = vpow.pop %v509
        %v511 = vsel %vm261, %v510, 0.0
        %512 = vadd.xlane.f32.xlu0 %v511
        %v513 = vpop.xlane.xlu0 %512
        %514 = vrot.lane.b32.xlu0 %v250, 56
        %v515 = vpop.permute.xlu0 %514
        %v518 = vsel %vm261, %v510, 0
        %520 = vmatprep.subr.mxu0 0.0
        %521 = vmatpush1.msra.mxu0 %v515
        %522 = vmatprep.subr.mxu0 0.0
        %523 = vmatpush1.msra.mxu0 0.0
        %524 = vmatprep.subr.mxu0 0.0
        %525 = vmatpush1.msra.mxu0 0.0
        %526 = vmatprep.subr.mxu0 0.0
        %527 = vmatpush1.msra.mxu0 0.0
        %528 = vmatprep.subr.mxu0 0.0
        %529 = vmatpush1.msra.mxu0 0.0
        %530 = vmatprep.subr.mxu0 0.0
        %531 = vmatpush1.msra.mxu0 0.0
        %532 = vmatprep.subr.mxu0 0.0
        %533 = vmatpush1.msra.mxu0 0.0
        %534 = vmatprep.subr.mxu0 0.0
        %535 = vmatpush1.msra.mxu0 0.0
        %536 = vmatprep.subr.mxu0 0.0
        %537 = vmatpush1.msra.mxu0 0.0
        %538 = vmatprep.subr.mxu0 0.0
        %539 = vmatpush1.msra.mxu0 0.0
        %540 = vmatprep.subr.mxu0 0.0
        %541 = vmatpush1.msra.mxu0 0.0
        %542 = vmatprep.subr.mxu0 0.0
        %543 = vmatpush1.msra.mxu0 0.0
        %544 = vmatprep.subr.mxu0 0.0
        %545 = vmatpush1.msra.mxu0 0.0
        %546 = vmatprep.subr.mxu0 0.0
        %547 = vmatpush1.msra.mxu0 0.0
        %548 = vmatprep.subr.mxu0 0.0
        %549 = vmatpush1.msra.mxu0 0.0
        %550 = vmatprep.subr.mxu0 0.0
        %551 = vmatpush1.msra.mxu0 0.0
        %552 = vmatprep.subr.mxu0 0.0
        %553 = vmatpush1.msra.mxu0 0.0
        %554 = vmatprep.subr.mxu0 0.0
        %555 = vmatpush1.msra.mxu0 0.0
        %556 = vmatprep.subr.mxu0 0.0
        %557 = vmatpush1.msra.mxu0 0.0
        %558 = vmatprep.subr.mxu0 0.0
        %559 = vmatpush1.msra.mxu0 0.0
        %560 = vmatprep.subr.mxu0 0.0
        %561 = vmatpush1.msra.mxu0 0.0
        %562 = vmatprep.subr.mxu0 0.0
        %563 = vmatpush1.msra.mxu0 0.0
        %564 = vmatprep.subr.mxu0 0.0
        %565 = vmatpush1.msra.mxu0 0.0
        %566 = vmatprep.subr.mxu0 0.0
        %567 = vmatpush1.msra.mxu0 0.0
        %568 = vmatprep.subr.mxu0 0.0
        %569 = vmatpush1.msra.mxu0 0.0
        %570 = vmatprep.subr.mxu0 0.0
        %571 = vmatpush1.msra.mxu0 0.0
        %572 = vmatprep.subr.mxu0 0.0
        %573 = vmatpush1.msra.mxu0 0.0
        %574 = vmatprep.subr.mxu0 0.0
        %575 = vmatpush1.msra.mxu0 0.0
        %576 = vmatprep.subr.mxu0 0.0
        %577 = vmatpush1.msra.mxu0 0.0
        %578 = vmatprep.subr.mxu0 0.0
        %579 = vmatpush1.msra.mxu0 0.0
        %580 = vmatprep.subr.mxu0 0.0
        %581 = vmatpush1.msra.mxu0 0.0
        %582 = vmatprep.subr.mxu0 0.0
        %583 = vmatpush1.msra.mxu0 0.0
        %584 = vmatprep.mubr.f32.mxu0 0.0
        %585 = vmatmul.mubr.f32.gmra.mrb[0].mxu0 %v518
        %v586 = vpop.f32.mrb[0].mxu0
        %v587 = vadd.f32 0.0, %v586
        %v588 = vpop.f32.mrb[0].mxu0
        %589 = vdwg.mxu0
        %v590 = vrcp.pop %v513
        %v591 = vmul.f32 %v587, %v590
        %592 = vrot.lane.b32.xlu0 %v250, 112
        %v593 = vpop.permute.xlu0 %592
        %594 = vrot.lane.b32.xlu0 %v250, 80
        %v595 = vpop.permute.xlu0 %594
        %v596 = vsel %vm261, %v593, 0
        %v598 = vsel %vm261, %v595, 0
        %600 = vmatprep.subr.mxu0 0.0
        %601 = vmatpush1.xpose.msra.mxu0 %v598
        %602 = vmatprep.subr.mxu0 0.0
        %603 = vmatpush1.xpose.msra.mxu0 0.0
        %604 = vmatprep.subr.mxu0 0.0
        %605 = vmatpush1.xpose.msra.mxu0 0.0
        %606 = vmatprep.subr.mxu0 0.0
        %607 = vmatpush1.xpose.msra.mxu0 0.0
        %608 = vmatprep.subr.mxu0 0.0
        %609 = vmatpush1.xpose.msra.mxu0 0.0
        %610 = vmatprep.subr.mxu0 0.0
        %611 = vmatpush1.xpose.msra.mxu0 0.0
        %612 = vmatprep.subr.mxu0 0.0
        %613 = vmatpush1.xpose.msra.mxu0 0.0
        %614 = vmatprep.subr.mxu0 0.0
        %615 = vmatpush1.xpose.msra.mxu0 0.0
        %616 = vmatprep.subr.mxu0 0.0
        %617 = vmatpush1.xpose.msra.mxu0 0.0
        %618 = vmatprep.subr.mxu0 0.0
        %619 = vmatpush1.xpose.msra.mxu0 0.0
        %620 = vmatprep.subr.mxu0 0.0
        %621 = vmatpush1.xpose.msra.mxu0 0.0
        %622 = vmatprep.subr.mxu0 0.0
        %623 = vmatpush1.xpose.msra.mxu0 0.0
        %624 = vmatprep.subr.mxu0 0.0
        %625 = vmatpush1.xpose.msra.mxu0 0.0
        %626 = vmatprep.subr.mxu0 0.0
        %627 = vmatpush1.xpose.msra.mxu0 0.0
        %628 = vmatprep.subr.mxu0 0.0
        %629 = vmatpush1.xpose.msra.mxu0 0.0
        %630 = vmatprep.subr.mxu0 0.0
        %631 = vmatpush1.xpose.msra.mxu0 0.0
        %632 = vmatprep.subr.mxu0 0.0
        %633 = vmatpush1.xpose.msra.mxu0 0.0
        %634 = vmatprep.subr.mxu0 0.0
        %635 = vmatpush1.xpose.msra.mxu0 0.0
        %636 = vmatprep.subr.mxu0 0.0
        %637 = vmatpush1.xpose.msra.mxu0 0.0
        %638 = vmatprep.subr.mxu0 0.0
        %639 = vmatpush1.xpose.msra.mxu0 0.0
        %640 = vmatprep.subr.mxu0 0.0
        %641 = vmatpush1.xpose.msra.mxu0 0.0
        %642 = vmatprep.subr.mxu0 0.0
        %643 = vmatpush1.xpose.msra.mxu0 0.0
        %644 = vmatprep.subr.mxu0 0.0
        %645 = vmatpush1.xpose.msra.mxu0 0.0
        %646 = vmatprep.subr.mxu0 0.0
        %647 = vmatpush1.xpose.msra.mxu0 0.0
        %648 = vmatprep.subr.mxu0 0.0
        %649 = vmatpush1.xpose.msra.mxu0 0.0
        %650 = vmatprep.subr.mxu0 0.0
        %651 = vmatpush1.xpose.msra.mxu0 0.0
        %652 = vmatprep.subr.mxu0 0.0
        %653 = vmatpush1.xpose.msra.mxu0 0.0
        %654 = vmatprep.subr.mxu0 0.0
        %655 = vmatpush1.xpose.msra.mxu0 0.0
        %656 = vmatprep.subr.mxu0 0.0
        %657 = vmatpush1.xpose.msra.mxu0 0.0
        %658 = vmatprep.subr.mxu0 0.0
        %659 = vmatpush1.xpose.msra.mxu0 0.0
        %660 = vmatprep.subr.mxu0 0.0
        %661 = vmatpush1.xpose.msra.mxu0 0.0
        %662 = vmatprep.subr.mxu0 0.0
        %663 = vmatpush1.xpose.msra.mxu0 0.0
        %664 = vmatprep.mubr.f32.mxu0 0.0
        %665 = vmatmul.mubr.f32.gmra.mrb[0].mxu0 %v596
        %v666 = vpop.f32.mrb[0].mxu0
        %v667 = vadd.f32 0.0, %v666
        %v668 = vpop.f32.mrb[0].mxu0
        %669 = vdwg.mxu0
        %v670 = vmul.f32 %v667, 0.35355338
        %v671 = vsel %vm257, %v670, -1e+30
        %v672 = vsel %vm261, %v671, -inf
        %673 = vmax.xlane.f32.xlu0 %v672
        %v674 = vpop.xlane.xlu0 %673
        %v675 = vsub.f32 %v671, %v674
        %v676 = vmul.f32 %v675, 1.442695
        %v677 = vpow.pop %v676
        %v678 = vsel %vm261, %v677, 0.0
        %679 = vadd.xlane.f32.xlu0 %v678
        %v680 = vpop.xlane.xlu0 %679
        %681 = vrot.lane.b32.xlu0 %v250, 48
        %v682 = vpop.permute.xlu0 %681
        %v685 = vsel %vm261, %v677, 0
        %687 = vmatprep.subr.mxu0 0.0
        %688 = vmatpush1.msra.mxu0 %v682
        %689 = vmatprep.subr.mxu0 0.0
        %690 = vmatpush1.msra.mxu0 0.0
        %691 = vmatprep.subr.mxu0 0.0
        %692 = vmatpush1.msra.mxu0 0.0
        %693 = vmatprep.subr.mxu0 0.0
        %694 = vmatpush1.msra.mxu0 0.0
        %695 = vmatprep.subr.mxu0 0.0
        %696 = vmatpush1.msra.mxu0 0.0
        %697 = vmatprep.subr.mxu0 0.0
        %698 = vmatpush1.msra.mxu0 0.0
        %699 = vmatprep.subr.mxu0 0.0
        %700 = vmatpush1.msra.mxu0 0.0
        %701 = vmatprep.subr.mxu0 0.0
        %702 = vmatpush1.msra.mxu0 0.0
        %703 = vmatprep.subr.mxu0 0.0
        %704 = vmatpush1.msra.mxu0 0.0
        %705 = vmatprep.subr.mxu0 0.0
        %706 = vmatpush1.msra.mxu0 0.0
        %707 = vmatprep.subr.mxu0 0.0
        %708 = vmatpush1.msra.mxu0 0.0
        %709 = vmatprep.subr.mxu0 0.0
        %710 = vmatpush1.msra.mxu0 0.0
        %711 = vmatprep.subr.mxu0 0.0
        %712 = vmatpush1.msra.mxu0 0.0
        %713 = vmatprep.subr.mxu0 0.0
        %714 = vmatpush1.msra.mxu0 0.0
        %715 = vmatprep.subr.mxu0 0.0
        %716 = vmatpush1.msra.mxu0 0.0
        %717 = vmatprep.subr.mxu0 0.0
        %718 = vmatpush1.msra.mxu0 0.0
        %719 = vmatprep.subr.mxu0 0.0
        %720 = vmatpush1.msra.mxu0 0.0
        %721 = vmatprep.subr.mxu0 0.0
        %722 = vmatpush1.msra.mxu0 0.0
        %723 = vmatprep.subr.mxu0 0.0
        %724 = vmatpush1.msra.mxu0 0.0
        %725 = vmatprep.subr.mxu0 0.0
        %726 = vmatpush1.msra.mxu0 0.0
        %727 = vmatprep.subr.mxu0 0.0
        %728 = vmatpush1.msra.mxu0 0.0
        %729 = vmatprep.subr.mxu0 0.0
        %730 = vmatpush1.msra.mxu0 0.0
        %731 = vmatprep.subr.mxu0 0.0
        %732 = vmatpush1.msra.mxu0 0.0
        %733 = vmatprep.subr.mxu0 0.0
        %734 = vmatpush1.msra.mxu0 0.0
        %735 = vmatprep.subr.mxu0 0.0
        %736 = vmatpush1.msra.mxu0 0.0
        %737 = vmatprep.subr.mxu0 0.0
        %738 = vmatpush1.msra.mxu0 0.0
        %739 = vmatprep.subr.mxu0 0.0
        %740 = vmatpush1.msra.mxu0 0.0
        %741 = vmatprep.subr.mxu0 0.0
        %742 = vmatpush1.msra.mxu0 0.0
        %743 = vmatprep.subr.mxu0 0.0
        %744 = vmatpush1.msra.mxu0 0.0
        %745 = vmatprep.subr.mxu0 0.0
        %746 = vmatpush1.msra.mxu0 0.0
        %747 = vmatprep.subr.mxu0 0.0
        %748 = vmatpush1.msra.mxu0 0.0
        %749 = vmatprep.subr.mxu0 0.0
        %750 = vmatpush1.msra.mxu0 0.0
        %751 = vmatprep.mubr.f32.mxu0 0.0
        %752 = vmatmul.mubr.f32.gmra.mrb[0].mxu0 %v685
        %v753 = vpop.f32.mrb[0].mxu0
        %v754 = vadd.f32 0.0, %v753
        %v755 = vpop.f32.mrb[0].mxu0
        %756 = vdwg.mxu0
        %v757 = vrcp.pop %v680
        %v758 = vmul.f32 %v754, %v757
        %759 = vrot.lane.b32.xlu0 %v250, 104
        %v760 = vpop.permute.xlu0 %759
        %761 = vrot.lane.b32.xlu0 %v250, 72
        %v762 = vpop.permute.xlu0 %761
        %v763 = vsel %vm261, %v760, 0
        %v765 = vsel %vm261, %v762, 0
        %767 = vmatprep.subr.mxu0 0.0
        %768 = vmatpush1.xpose.msra.mxu0 %v765
        %769 = vmatprep.subr.mxu0 0.0
        %770 = vmatpush1.xpose.msra.mxu0 0.0
        %771 = vmatprep.subr.mxu0 0.0
        %772 = vmatpush1.xpose.msra.mxu0 0.0
        %773 = vmatprep.subr.mxu0 0.0
        %774 = vmatpush1.xpose.msra.mxu0 0.0
        %775 = vmatprep.subr.mxu0 0.0
        %776 = vmatpush1.xpose.msra.mxu0 0.0
        %777 = vmatprep.subr.mxu0 0.0
        %778 = vmatpush1.xpose.msra.mxu0 0.0
        %779 = vmatprep.subr.mxu0 0.0
        %780 = vmatpush1.xpose.msra.mxu0 0.0
        %781 = vmatprep.subr.mxu0 0.0
        %782 = vmatpush1.xpose.msra.mxu0 0.0
        %783 = vmatprep.subr.mxu0 0.0
        %784 = vmatpush1.xpose.msra.mxu0 0.0
        %785 = vmatprep.subr.mxu0 0.0
        %786 = vmatpush1.xpose.msra.mxu0 0.0
        %787 = vmatprep.subr.mxu0 0.0
        %788 = vmatpush1.xpose.msra.mxu0 0.0
        %789 = vmatprep.subr.mxu0 0.0
        %790 = vmatpush1.xpose.msra.mxu0 0.0
        %791 = vmatprep.subr.mxu0 0.0
        %792 = vmatpush1.xpose.msra.mxu0 0.0
        %793 = vmatprep.subr.mxu0 0.0
        %794 = vmatpush1.xpose.msra.mxu0 0.0
        %795 = vmatprep.subr.mxu0 0.0
        %796 = vmatpush1.xpose.msra.mxu0 0.0
        %797 = vmatprep.subr.mxu0 0.0
        %798 = vmatpush1.xpose.msra.mxu0 0.0
        %799 = vmatprep.subr.mxu0 0.0
        %800 = vmatpush1.xpose.msra.mxu0 0.0
        %801 = vmatprep.subr.mxu0 0.0
        %802 = vmatpush1.xpose.msra.mxu0 0.0
        %803 = vmatprep.subr.mxu0 0.0
        %804 = vmatpush1.xpose.msra.mxu0 0.0
        %805 = vmatprep.subr.mxu0 0.0
        %806 = vmatpush1.xpose.msra.mxu0 0.0
        %807 = vmatprep.subr.mxu0 0.0
        %808 = vmatpush1.xpose.msra.mxu0 0.0
        %809 = vmatprep.subr.mxu0 0.0
        %810 = vmatpush1.xpose.msra.mxu0 0.0
        %811 = vmatprep.subr.mxu0 0.0
        %812 = vmatpush1.xpose.msra.mxu0 0.0
        %813 = vmatprep.subr.mxu0 0.0
        %814 = vmatpush1.xpose.msra.mxu0 0.0
        %815 = vmatprep.subr.mxu0 0.0
        %816 = vmatpush1.xpose.msra.mxu0 0.0
        %817 = vmatprep.subr.mxu0 0.0
        %818 = vmatpush1.xpose.msra.mxu0 0.0
        %819 = vmatprep.subr.mxu0 0.0
        %820 = vmatpush1.xpose.msra.mxu0 0.0
        %821 = vmatprep.subr.mxu0 0.0
        %822 = vmatpush1.xpose.msra.mxu0 0.0
        %823 = vmatprep.subr.mxu0 0.0
        %824 = vmatpush1.xpose.msra.mxu0 0.0
        %825 = vmatprep.subr.mxu0 0.0
        %826 = vmatpush1.xpose.msra.mxu0 0.0
        %827 = vmatprep.subr.mxu0 0.0
        %828 = vmatpush1.xpose.msra.mxu0 0.0
        %829 = vmatprep.subr.mxu0 0.0
        %830 = vmatpush1.xpose.msra.mxu0 0.0
        %831 = vmatprep.mubr.f32.mxu0 0.0
        %832 = vmatmul.mubr.f32.gmra.mrb[0].mxu0 %v763
        %v833 = vpop.f32.mrb[0].mxu0
        %v834 = vadd.f32 0.0, %v833
        %v835 = vpop.f32.mrb[0].mxu0
        %836 = vdwg.mxu0
        %v837 = vmul.f32 %v834, 0.35355338
        %v838 = vsel %vm257, %v837, -1e+30
        %v839 = vsel %vm261, %v838, -inf
        %840 = vmax.xlane.f32.xlu0 %v839
        %v841 = vpop.xlane.xlu0 %840
        %v842 = vsub.f32 %v838, %v841
        %v843 = vmul.f32 %v842, 1.442695
        %v844 = vpow.pop %v843
        %v845 = vsel %vm261, %v844, 0.0
        %846 = vadd.xlane.f32.xlu0 %v845
        %v847 = vpop.xlane.xlu0 %846
        %848 = vrot.lane.b32.xlu0 %v250, 40
        %v849 = vpop.permute.xlu0 %848
        %v852 = vsel %vm261, %v844, 0
        %854 = vmatprep.subr.mxu0 0.0
        %855 = vmatpush1.msra.mxu0 %v849
        %856 = vmatprep.subr.mxu0 0.0
        %857 = vmatpush1.msra.mxu0 0.0
        %858 = vmatprep.subr.mxu0 0.0
        %859 = vmatpush1.msra.mxu0 0.0
        %860 = vmatprep.subr.mxu0 0.0
        %861 = vmatpush1.msra.mxu0 0.0
        %862 = vmatprep.subr.mxu0 0.0
        %863 = vmatpush1.msra.mxu0 0.0
        %864 = vmatprep.subr.mxu0 0.0
        %865 = vmatpush1.msra.mxu0 0.0
        %866 = vmatprep.subr.mxu0 0.0
        %867 = vmatpush1.msra.mxu0 0.0
        %868 = vmatprep.subr.mxu0 0.0
        %869 = vmatpush1.msra.mxu0 0.0
        %870 = vmatprep.subr.mxu0 0.0
        %871 = vmatpush1.msra.mxu0 0.0
        %872 = vmatprep.subr.mxu0 0.0
        %873 = vmatpush1.msra.mxu0 0.0
        %874 = vmatprep.subr.mxu0 0.0
        %875 = vmatpush1.msra.mxu0 0.0
        %876 = vmatprep.subr.mxu0 0.0
        %877 = vmatpush1.msra.mxu0 0.0
        %878 = vmatprep.subr.mxu0 0.0
        %879 = vmatpush1.msra.mxu0 0.0
        %880 = vmatprep.subr.mxu0 0.0
        %881 = vmatpush1.msra.mxu0 0.0
        %882 = vmatprep.subr.mxu0 0.0
        %883 = vmatpush1.msra.mxu0 0.0
        %884 = vmatprep.subr.mxu0 0.0
        %885 = vmatpush1.msra.mxu0 0.0
        %886 = vmatprep.subr.mxu0 0.0
        %887 = vmatpush1.msra.mxu0 0.0
        %888 = vmatprep.subr.mxu0 0.0
        %889 = vmatpush1.msra.mxu0 0.0
        %890 = vmatprep.subr.mxu0 0.0
        %891 = vmatpush1.msra.mxu0 0.0
        %892 = vmatprep.subr.mxu0 0.0
        %893 = vmatpush1.msra.mxu0 0.0
        %894 = vmatprep.subr.mxu0 0.0
        %895 = vmatpush1.msra.mxu0 0.0
        %896 = vmatprep.subr.mxu0 0.0
        %897 = vmatpush1.msra.mxu0 0.0
        %898 = vmatprep.subr.mxu0 0.0
        %899 = vmatpush1.msra.mxu0 0.0
        %900 = vmatprep.subr.mxu0 0.0
        %901 = vmatpush1.msra.mxu0 0.0
        %902 = vmatprep.subr.mxu0 0.0
        %903 = vmatpush1.msra.mxu0 0.0
        %904 = vmatprep.subr.mxu0 0.0
        %905 = vmatpush1.msra.mxu0 0.0
        %906 = vmatprep.subr.mxu0 0.0
        %907 = vmatpush1.msra.mxu0 0.0
        %908 = vmatprep.subr.mxu0 0.0
        %909 = vmatpush1.msra.mxu0 0.0
        %910 = vmatprep.subr.mxu0 0.0
        %911 = vmatpush1.msra.mxu0 0.0
        %912 = vmatprep.subr.mxu0 0.0
        %913 = vmatpush1.msra.mxu0 0.0
        %914 = vmatprep.subr.mxu0 0.0
        %915 = vmatpush1.msra.mxu0 0.0
        %916 = vmatprep.subr.mxu0 0.0
        %917 = vmatpush1.msra.mxu0 0.0
        %918 = vmatprep.mubr.f32.mxu0 0.0
        %919 = vmatmul.mubr.f32.gmra.mrb[0].mxu0 %v852
        %v920 = vpop.f32.mrb[0].mxu0
        %v921 = vadd.f32 0.0, %v920
        %v922 = vpop.f32.mrb[0].mxu0
        %923 = vdwg.mxu0
        %v924 = vrcp.pop %v847
        %v925 = vmul.f32 %v921, %v924
        %927 = vrot.lane.b32.xlu0 %v591, 8
        %v928 = vpop.permute.xlu0 %927
        %931 = vrot.lane.b32.xlu0 %v758, 16
        %v932 = vpop.permute.xlu0 %931
        %935 = vrot.lane.b32.xlu0 %v925, 24
        %v936 = vpop.permute.xlu0 %935
        %v938 = vsel %vm261, %v424, %v928
        %vm939 = vcmask 130048
        %v940 = vsel %vm939, %v938, %v932
        %vm941 = vcmask 195584
        %v942 = vsel %vm941, %v940, %v936
        %943 = vst.msk [vmem:[%s173] sm:$0xff] %vm179, %v942
        %s944 = sand.u32 %s75, 1
        %s945 = scalar_lea.sflag [#allocation4], %s944
        %s946 = sand.u32 %s75, 1
        %s947 = smul.addr %s946, 8
        %s948 = scalar_lea.vmem [#allocation7], %s947
        // Predicated region
        $region37: #{tpu_custom_call.1} parent=27 // pred_check
          %p949 = pneg %p85
        $region38: #{tpu_custom_call.1} parent=27 // pred_check_branch
          %951 = sbr.rel (%p949) target = $region40
        $region39: #{tpu_custom_call.1} parent=27 // pred_region
          %s953 = ssub.s32 128, 128
          %954 = vsyncadd %s945, %s953
          %s955 = smul.addr %s20, 128
          %s956 = scalar_lea.hbm %s2, %s955
          %s958 = sshll.u32 %s948, 4
          %s959 = int_to_ptr.vmem [resolvable:$true] %s958
          %961 = dma.vmem_to_hbm [thread:$0]  %s959, 128, %s956, %s945
        $region40: #{tpu_custom_call.1} parent=27 // pred_fallthru
          _
      $region28: #{tpu_custom_call.1} parent=5 // pred_fallthru
        _
      %p962 = scmp.le.s32.totalorder 2, %s15
      // Predicated region
      $region41: #{tpu_custom_call.1} parent=5 // pred_check
        %p963 = pneg %p962
      $region42: #{tpu_custom_call.1} parent=5 // pred_check_branch
        %965 = sbr.rel (%p963) target = $region44
      $region43: #{tpu_custom_call.1} parent=5 // pred_region
        %s966 = ssub.s32 %s15, 2
        // Predicated region
        $region45: #{tpu_custom_call.1} parent=43 // pred_check
          %p967 = pneg %p91
        $region46: #{tpu_custom_call.1} parent=43 // pred_check_branch
          %969 = sbr.rel (%p967) target = $region48
        $region47: #{tpu_custom_call.1} parent=43 // pred_region
          %s970 = sand.u32 %s76, 1
          %s971 = scalar_lea.sflag [#allocation4], %s970
          %s972 = sand.u32 %s76, 1
          %s973 = smul.addr %s972, 8
          %s974 = scalar_lea.vmem [#allocation7], %s973
          %975 = dma.done %s971, 128
        $region48: #{tpu_custom_call.1} parent=43 // pred_fallthru
          _
      $region44: #{tpu_custom_call.1} parent=5 // pred_fallthru
        _
    $region6: #{tpu_custom_call.1} parent=1 // loop_footer
      %s19 = sadd.s32 1, %s15
    $region7: #{tpu_custom_call.1} parent=1 // loop_footer_branch
      %14 = sbr.rel target = $region3
    $region8: #{tpu_custom_call.1} parent=1 // loop_exit
      _
    %976 = vsyncpa [#allocation3], 1
    %s977 = scalar_lea.sflag [#allocation3], 1
    %978 = vsyncpa %s977, 1
    %979 = vsyncpa [#allocation6], 1
    %980 = vsyncpa [#allocation4], 1
    %s981 = scalar_lea.sflag [#allocation4], 1
    %982 = vsyncpa %s981, 1

</llo_original>
